<compile_context>
chip_gen: v6e
topology: v6e:2x2x1
jax: 0.10.0
libtpu: 0.0.40
codegen_flags: <defaults>
</compile_context>

<pallas_src>
import jax
import jax.numpy as jnp
from jax.experimental import pallas as pl
from jax.experimental.pallas import tpu as pltpu


def _band_weights(w_hwio, W):
    """Pack 3x3 HWIO conv weights into per-dy banded matmul slabs.

    Returns A of shape (3, W*C_in, W*C_out) with
        A[dy, (w+dx-1)*C_in + c, w*C_out + o] = w_hwio[dy, dx, c, o]
    for 0 <= w+dx-1 < W (taps that would hit horizontal zero padding are
    dropped), so that   out_row[h] = sum_dy x_row[h+dy-1] @ A[dy]
    is exactly the "SAME"-padded 3x3 convolution along W and C.
    """
    kh, kw, c_in, c_out = w_hwio.shape
    bands = []
    for dy in range(kh):
        a = jnp.zeros((W * c_in, W * c_out), jnp.float32)
        for dx in range(kw):
            # shift[w+dx-1, w] = 1  (out-of-range entries drop out of eye)
            shift = jnp.eye(W, W, k=1 - dx, dtype=jnp.float32)
            a = a + jnp.kron(shift, w_hwio[dy, dx].astype(jnp.float32))
        bands.append(a)
    return jnp.stack(bands)  # (3, W*C_in, W*C_out)


def _double_conv_kernel(H, W, C_in, C_out):
    wc_in = W * C_in
    wc_out = W * C_out

    def kernel(x_ref, w1_ref, b1_ref, w2_ref, b2_ref, o_ref):
        # x_ref : (1, H+2, W*C_in)   f32, rows zero-padded (vertical SAME pad)
        # w1_ref: (3, W*C_in,  W*C_out)  bf16 banded weights (conv1)
        # b1_ref: (1, W*C_out)  f32  (per-channel bias tiled along W)
        # w2_ref: (3, W*C_out, W*C_out)  bf16 banded weights (conv2)
        # b2_ref: (1, W*C_out)  f32
        # o_ref : (1, H, W*C_out)  lane-dense output slab
        x = x_ref[0]  # (H+2, W*C_in)

        # ---- conv1 (+bias) + ReLU: 3 wide-K bf16 MXU matmuls, f32 accum ----
        acc1 = jnp.broadcast_to(b1_ref[...], (H, wc_out)).astype(jnp.float32)
        for dy in range(3):
            acc1 = acc1 + jnp.dot(
                x[dy:dy + H, :].astype(jnp.bfloat16), w1_ref[dy],
                preferred_element_type=jnp.float32)
        h1 = jnp.maximum(acc1, 0.0)  # (H, W*C_out) f32, stays in vregs

        # Vertical SAME padding for conv2: two zero rows, no scratch round trip.
        zrow = jnp.zeros((1, wc_out), jnp.float32)
        mid = jnp.concatenate([zrow, h1, zrow], axis=0)  # (H+2, W*C_out)

        # ---- conv2 (+bias) + ReLU ----
        acc2 = jnp.broadcast_to(b2_ref[...], (H, wc_out)).astype(jnp.float32)
        for dy in range(3):
            acc2 = acc2 + jnp.dot(
                mid[dy:dy + H, :].astype(jnp.bfloat16), w2_ref[dy],
                preferred_element_type=jnp.float32)
        o_ref[0] = jnp.maximum(acc2, 0.0).astype(o_ref.dtype)

    return kernel


def double_conv(x_nhwc, w1, b1, w2, b2):
    """DoubleConv forward. x_nhwc: (N,H,W,C_in) f32; w: HWIO 3x3; b: (C,).

    (The PyTorch module is NCHW/OIHW; semantics are identical — a caller with
    NCHW data transposes at the boundary.)
    """
    N, H, W, C_in = x_nhwc.shape
    C_out = w1.shape[-1]

    # Lane-dense 2-D activation layout: merge (W, C) onto the lane axis and
    # zero-pad only the rows (horizontal padding is folded into the bands).
    x2 = jnp.pad(x_nhwc.reshape(N, H, W * C_in), ((0, 0), (1, 1), (0, 0)))

    wb1 = _band_weights(w1, W).astype(jnp.bfloat16)   # (3, W*C_in,  W*C_out)
    wb2 = _band_weights(w2, W).astype(jnp.bfloat16)   # (3, W*C_out, W*C_out)
    b1_row = jnp.tile(b1.astype(jnp.float32), W)[None, :]   # (1, W*C_out)
    b2_row = jnp.tile(b2.astype(jnp.float32), W)[None, :]   # (1, W*C_out)

    kernel = _double_conv_kernel(H, W, C_in, C_out)

    out2 = pl.pallas_call(
        kernel,
        out_shape=jax.ShapeDtypeStruct((N, H, W * C_out), x_nhwc.dtype),
        grid_spec=pltpu.PrefetchScalarGridSpec(
            num_scalar_prefetch=0,
            grid=(N,),
            in_specs=[
                pl.BlockSpec((1, H + 2, W * C_in), lambda n: (n, 0, 0)),
                pl.BlockSpec((3, W * C_in, W * C_out), lambda n: (0, 0, 0)),
                pl.BlockSpec((1, W * C_out), lambda n: (0, 0)),
                pl.BlockSpec((3, W * C_out, W * C_out), lambda n: (0, 0, 0)),
                pl.BlockSpec((1, W * C_out), lambda n: (0, 0)),
            ],
            out_specs=pl.BlockSpec((1, H, W * C_out), lambda n: (n, 0, 0)),
        ),
        compiler_params=pltpu.CompilerParams(
            dimension_semantics=("parallel",)),
    )(x2, wb1, b1_row, wb2, b2_row)

    return out2.reshape(N, H, W, C_out)


def _reference(x_nhwc, w1, b1, w2, b2):
    dn = ("NHWC", "HWIO", "NHWC")
    y = jax.lax.conv_general_dilated(x_nhwc, w1, (1, 1), "SAME",
                                     dimension_numbers=dn) + b1
    y = jnp.maximum(y, 0.0)
    y = jax.lax.conv_general_dilated(y, w2, (1, 1), "SAME",
                                     dimension_numbers=dn) + b2
    return jnp.maximum(y, 0.0)


if __name__ == "__main__":
    N, H, W = 2, 16, 16
    C_in, C_out = 4, 8

    key = jax.random.PRNGKey(0)
    kx, kw1, kb1, kw2, kb2 = jax.random.split(key, 5)

    # deterministic synthetic parameters (shapes follow nn.Conv2d(.., 3, padding=1))
    fan1 = C_in * 9
    fan2 = C_out * 9
    x = jax.random.normal(kx, (N, H, W, C_in), jnp.float32)
    w1 = jax.random.uniform(kw1, (3, 3, C_in, C_out), jnp.float32,
                            -1.0, 1.0) / jnp.sqrt(fan1)
    b1 = jax.random.uniform(kb1, (C_out,), jnp.float32, -1.0, 1.0) / jnp.sqrt(fan1)
    w2 = jax.random.uniform(kw2, (3, 3, C_out, C_out), jnp.float32,
                            -1.0, 1.0) / jnp.sqrt(fan2)
    b2 = jax.random.uniform(kb2, (C_out,), jnp.float32, -1.0, 1.0) / jnp.sqrt(fan2)

    out = double_conv(x, w1, b1, w2, b2)
    out = jax.block_until_ready(out)

    ref = _reference(x, w1, b1, w2, b2)
    assert out.shape == (N, H, W, C_out)
    # Matmul operands are bf16 (accumulation in f32), so compare against the
    # f32 reference with a bf16-appropriate tolerance.
    assert jnp.allclose(out, ref, atol=2e-2, rtol=2e-2), "mismatch vs reference"

    print("KERNEL_OK")
</pallas_src>

<mosaic_0001>
module attributes {stable_mosaic.version = 11 : i64} {
  func.func @kernel(%arg0: i32, %arg1: memref<1x18x64xf32, #tpu.memory_space<vmem>>, %arg2: memref<3x64x128xbf16, #tpu.memory_space<vmem>>, %arg3: memref<1x128xf32, #tpu.memory_space<vmem>>, %arg4: memref<3x128x128xbf16, #tpu.memory_space<vmem>>, %arg5: memref<1x128xf32, #tpu.memory_space<vmem>>, %arg6: memref<1x16x128xf32, #tpu.memory_space<vmem>>) attributes {dimension_semantics = [#tpu.dimension_semantics<parallel>], iteration_bounds = array<i64: 2>, scalar_prefetch = 0 : i64, scratch_operands = 0 : i64, tpu.core_type = #tpu.core_type<tc>, window_params = [{transform_indices = @transform_0, window_bounds = array<i64: 1, 18, 64>}, {pipeline_mode = #tpu.pipeline_mode<synchronous>, transform_indices = @transform_1, window_bounds = array<i64: 3, 64, 128>}, {pipeline_mode = #tpu.pipeline_mode<synchronous>, transform_indices = @transform_2, window_bounds = array<i64: 1, 128>}, {pipeline_mode = #tpu.pipeline_mode<synchronous>, transform_indices = @transform_3, window_bounds = array<i64: 3, 128, 128>}, {pipeline_mode = #tpu.pipeline_mode<synchronous>, transform_indices = @transform_4, window_bounds = array<i64: 1, 128>}, {transform_indices = @transform_5, window_bounds = array<i64: 1, 16, 128>}]} {
    %c0 = arith.constant 0 : index
    %c0_0 = arith.constant 0 : index
    %c0_1 = arith.constant 0 : index
    %0 = vector.load %arg1[%c0, %c0_0, %c0_1] : memref<1x18x64xf32, #tpu.memory_space<vmem>>, vector<1x18x64xf32>
    %1 = vector.shape_cast %0 : vector<1x18x64xf32> to vector<18x64xf32>
    %c0_2 = arith.constant 0 : index
    %c0_3 = arith.constant 0 : index
    %2 = vector.load %arg3[%c0_2, %c0_3] : memref<1x128xf32, #tpu.memory_space<vmem>>, vector<1x128xf32>
    %3 = vector.shape_cast %2 : vector<1x128xf32> to vector<1x128xf32>
    %4 = vector.broadcast %3 : vector<1x128xf32> to vector<16x128xf32>
    %5 = vector.extract_strided_slice %1 {offsets = [0, 0], sizes = [16, 64], strides = [1, 1]} : vector<18x64xf32> to vector<16x64xf32>
    %6 = arith.truncf %5 : vector<16x64xf32> to vector<16x64xbf16>
    %c0_4 = arith.constant 0 : index
    %c0_5 = arith.constant 0 : index
    %c0_6 = arith.constant 0 : index
    %7 = vector.load %arg2[%c0_4, %c0_5, %c0_6] : memref<3x64x128xbf16, #tpu.memory_space<vmem>>, vector<1x64x128xbf16>
    %8 = vector.shape_cast %7 : vector<1x64x128xbf16> to vector<64x128xbf16>
    %cst = arith.constant dense<0.000000e+00> : vector<16x128xf32>
    %9 = tpu.matmul %6, %8, %cst {dimension_numbers = #tpu.dot_dimension_numbers<[1], [0], [0], [1], [0, 0, 1, 1], [], []>} : vector<16x64xbf16>, vector<64x128xbf16>, vector<16x128xf32> -> vector<16x128xf32>
    %10 = arith.addf %4, %9 : vector<16x128xf32>
    %11 = vector.extract_strided_slice %1 {offsets = [1, 0], sizes = [16, 64], strides = [1, 1]} : vector<18x64xf32> to vector<16x64xf32>
    %12 = arith.truncf %11 : vector<16x64xf32> to vector<16x64xbf16>
    %c1 = arith.constant 1 : index
    %c0_7 = arith.constant 0 : index
    %c0_8 = arith.constant 0 : index
    %13 = vector.load %arg2[%c1, %c0_7, %c0_8] : memref<3x64x128xbf16, #tpu.memory_space<vmem>>, vector<1x64x128xbf16>
    %14 = vector.shape_cast %13 : vector<1x64x128xbf16> to vector<64x128xbf16>
    %cst_9 = arith.constant dense<0.000000e+00> : vector<16x128xf32>
    %15 = tpu.matmul %12, %14, %cst_9 {dimension_numbers = #tpu.dot_dimension_numbers<[1], [0], [0], [1], [0, 0, 1, 1], [], []>} : vector<16x64xbf16>, vector<64x128xbf16>, vector<16x128xf32> -> vector<16x128xf32>
    %16 = arith.addf %10, %15 : vector<16x128xf32>
    %17 = vector.extract_strided_slice %1 {offsets = [2, 0], sizes = [16, 64], strides = [1, 1]} : vector<18x64xf32> to vector<16x64xf32>
    %18 = arith.truncf %17 : vector<16x64xf32> to vector<16x64xbf16>
    %c2 = arith.constant 2 : index
    %c0_10 = arith.constant 0 : index
    %c0_11 = arith.constant 0 : index
    %19 = vector.load %arg2[%c2, %c0_10, %c0_11] : memref<3x64x128xbf16, #tpu.memory_space<vmem>>, vector<1x64x128xbf16>
    %20 = vector.shape_cast %19 : vector<1x64x128xbf16> to vector<64x128xbf16>
    %cst_12 = arith.constant dense<0.000000e+00> : vector<16x128xf32>
    %21 = tpu.matmul %18, %20, %cst_12 {dimension_numbers = #tpu.dot_dimension_numbers<[1], [0], [0], [1], [0, 0, 1, 1], [], []>} : vector<16x64xbf16>, vector<64x128xbf16>, vector<16x128xf32> -> vector<16x128xf32>
    %22 = arith.addf %16, %21 : vector<16x128xf32>
    %cst_13 = arith.constant 0.000000e+00 : f32
    %23 = vector.broadcast %cst_13 : f32 to vector<16x128xf32>
    %24 = arith.maximumf %22, %23 : vector<16x128xf32>
    %cst_14 = arith.constant 0.000000e+00 : f32
    %25 = vector.broadcast %cst_14 : f32 to vector<1x128xf32>
    %26 = tpu.concatenate %25, %24, %25 in 0 : vector<1x128xf32>, vector<16x128xf32>, vector<1x128xf32> -> vector<18x128xf32>
    %c0_15 = arith.constant 0 : index
    %c0_16 = arith.constant 0 : index
    %27 = vector.load %arg5[%c0_15, %c0_16] : memref<1x128xf32, #tpu.memory_space<vmem>>, vector<1x128xf32>
    %28 = vector.shape_cast %27 : vector<1x128xf32> to vector<1x128xf32>
    %29 = vector.broadcast %28 : vector<1x128xf32> to vector<16x128xf32>
    %30 = vector.extract_strided_slice %26 {offsets = [0, 0], sizes = [16, 128], strides = [1, 1]} : vector<18x128xf32> to vector<16x128xf32>
    %31 = arith.truncf %30 : vector<16x128xf32> to vector<16x128xbf16>
    %c0_17 = arith.constant 0 : index
    %c0_18 = arith.constant 0 : index
    %c0_19 = arith.constant 0 : index
    %32 = vector.load %arg4[%c0_17, %c0_18, %c0_19] : memref<3x128x128xbf16, #tpu.memory_space<vmem>>, vector<1x128x128xbf16>
    %33 = vector.shape_cast %32 : vector<1x128x128xbf16> to vector<128x128xbf16>
    %cst_20 = arith.constant dense<0.000000e+00> : vector<16x128xf32>
    %34 = tpu.matmul %31, %33, %cst_20 {dimension_numbers = #tpu.dot_dimension_numbers<[1], [0], [0], [1], [0, 0, 1, 1], [], []>} : vector<16x128xbf16>, vector<128x128xbf16>, vector<16x128xf32> -> vector<16x128xf32>
    %35 = arith.addf %29, %34 : vector<16x128xf32>
    %36 = vector.extract_strided_slice %26 {offsets = [1, 0], sizes = [16, 128], strides = [1, 1]} : vector<18x128xf32> to vector<16x128xf32>
    %37 = arith.truncf %36 : vector<16x128xf32> to vector<16x128xbf16>
    %c1_21 = arith.constant 1 : index
    %c0_22 = arith.constant 0 : index
    %c0_23 = arith.constant 0 : index
    %38 = vector.load %arg4[%c1_21, %c0_22, %c0_23] : memref<3x128x128xbf16, #tpu.memory_space<vmem>>, vector<1x128x128xbf16>
    %39 = vector.shape_cast %38 : vector<1x128x128xbf16> to vector<128x128xbf16>
    %cst_24 = arith.constant dense<0.000000e+00> : vector<16x128xf32>
    %40 = tpu.matmul %37, %39, %cst_24 {dimension_numbers = #tpu.dot_dimension_numbers<[1], [0], [0], [1], [0, 0, 1, 1], [], []>} : vector<16x128xbf16>, vector<128x128xbf16>, vector<16x128xf32> -> vector<16x128xf32>
    %41 = arith.addf %35, %40 : vector<16x128xf32>
    %42 = vector.extract_strided_slice %26 {offsets = [2, 0], sizes = [16, 128], strides = [1, 1]} : vector<18x128xf32> to vector<16x128xf32>
    %43 = arith.truncf %42 : vector<16x128xf32> to vector<16x128xbf16>
    %c2_25 = arith.constant 2 : index
    %c0_26 = arith.constant 0 : index
    %c0_27 = arith.constant 0 : index
    %44 = vector.load %arg4[%c2_25, %c0_26, %c0_27] : memref<3x128x128xbf16, #tpu.memory_space<vmem>>, vector<1x128x128xbf16>
    %45 = vector.shape_cast %44 : vector<1x128x128xbf16> to vector<128x128xbf16>
    %cst_28 = arith.constant dense<0.000000e+00> : vector<16x128xf32>
    %46 = tpu.matmul %43, %45, %cst_28 {dimension_numbers = #tpu.dot_dimension_numbers<[1], [0], [0], [1], [0, 0, 1, 1], [], []>} : vector<16x128xbf16>, vector<128x128xbf16>, vector<16x128xf32> -> vector<16x128xf32>
    %47 = arith.addf %41, %46 : vector<16x128xf32>
    %cst_29 = arith.constant 0.000000e+00 : f32
    %48 = vector.broadcast %cst_29 : f32 to vector<16x128xf32>
    %49 = arith.maximumf %47, %48 : vector<16x128xf32>
    %c0_30 = arith.constant 0 : index
    %c0_31 = arith.constant 0 : index
    %c0_32 = arith.constant 0 : index
    %50 = vector.load %arg6[%c0_30, %c0_31, %c0_32] : memref<1x16x128xf32, #tpu.memory_space<vmem>>, vector<1x16x128xf32>
    %51 = vector.shape_cast %50 : vector<1x16x128xf32> to vector<16x128xf32>
    %52 = vector.shape_cast %49 : vector<16x128xf32> to vector<1x16x128xf32>
    tpu.vector_store %arg6[%c0_30, %c0_31, %c0_32], %52 {strides = array<i32>} : memref<1x16x128xf32, #tpu.memory_space<vmem>>, vector<1x16x128xf32>,
    return
  }
  func.func @transform_0(%arg0: i32) -> (i32, i32, i32) {
    %c0_i32 = arith.constant 0 : i32
    %c0_i32_0 = arith.constant 0 : i32
    %c0_i32_1 = arith.constant 0 : i32
    return %arg0, %c0_i32, %c0_i32_0 : i32, i32, i32
  }
  func.func @transform_1(%arg0: i32) -> (i32, i32, i32) {
    %c0_i32 = arith.constant 0 : i32
    %c0_i32_0 = arith.constant 0 : i32
    %c0_i32_1 = arith.constant 0 : i32
    %c0_i32_2 = arith.constant 0 : i32
    return %c0_i32, %c0_i32_0, %c0_i32_1 : i32, i32, i32
  }
  func.func @transform_2(%arg0: i32) -> (i32, i32) {
    %c0_i32 = arith.constant 0 : i32
    %c0_i32_0 = arith.constant 0 : i32
    %c0_i32_1 = arith.constant 0 : i32
    return %c0_i32, %c0_i32_0 : i32, i32
  }
  func.func @transform_3(%arg0: i32) -> (i32, i32, i32) {
    %c0_i32 = arith.constant 0 : i32
    %c0_i32_0 = arith.constant 0 : i32
    %c0_i32_1 = arith.constant 0 : i32
    %c0_i32_2 = arith.constant 0 : i32
    return %c0_i32, %c0_i32_0, %c0_i32_1 : i32, i32, i32
  }
  func.func @transform_4(%arg0: i32) -> (i32, i32) {
    %c0_i32 = arith.constant 0 : i32
    %c0_i32_0 = arith.constant 0 : i32
    %c0_i32_1 = arith.constant 0 : i32
    return %c0_i32, %c0_i32_0 : i32, i32
  }
  func.func @transform_5(%arg0: i32) -> (i32, i32, i32) {
    %c0_i32 = arith.constant 0 : i32
    %c0_i32_0 = arith.constant 0 : i32
    %c0_i32_1 = arith.constant 0 : i32
    return %arg0, %c0_i32, %c0_i32_0 : i32, i32, i32
  }
}

</mosaic_0001>

<llo_original>
// kernel: tpu_custom_call.1
$region0: #{tpu_custom_call.1}
  #allocation0 [shape = 'u32[]', space=smem, size = 0x4, offset = 0x4, fixed_abs, tag = 'smem constant byte address 0x4 - core index']
  #allocation1 [shape = 'u32[144,128]{1,0:T(1,128)}', space=vmem, size = 0x12000, scoped, tag = 'internal scratch']
  %s0 = inlined_call_operand.vmem [shape: f32[2,18,64], index: 0, kind: input, shape index: {}]
  %s1 = inlined_call_operand.hbm [shape: bf16[3,64,128], index: 1, kind: input, shape index: {}]
  %s2 = inlined_call_operand.vmem [shape: f32[1,128], index: 2, kind: input, shape index: {}]
  %s3 = inlined_call_operand.hbm [shape: bf16[3,128,128], index: 3, kind: input, shape index: {}]
  %s4 = inlined_call_operand.vmem [shape: f32[1,128], index: 4, kind: input, shape index: {}]
  %s5 = inlined_call_operand.hbm [shape: f32[2,16,128], index: 5, kind: output, shape index: {}]
  %s6 = sld [smem:[#allocation0]]
  $region61: #{tpu_custom_call.1} parent=0
    _
  %s8 = ssub.s32 1, %s6
  %s9 = scalar_select 0, %s8, %s6
  $region1: #{tpu_custom_call.1} parent=0
    #allocation2 [shape = 'u8[49152]{0}', space=vmem, size = 0xc000, scoped, tag = 'input window, operand 1, single buffered']
    #allocation3 [shape = 's32[2]{0}', space=sflag, size = 0x8, scoped, tag = 'scoped memory for tpu_custom_call.1']
    #allocation4 [shape = 's32[2]{0}', space=sflag, size = 0x8, scoped, tag = 'scoped memory for tpu_custom_call.1']
    #allocation5 [shape = 'u8[98304]{0}', space=vmem, size = 0x18000, scoped, tag = 'input window, operand 3, single buffered']
    #allocation6 [shape = 's32[1]{0}', space=sflag, size = 0x4, scoped, tag = 'scoped memory for tpu_custom_call.1']
    #allocation7 [shape = 'u8[16384]{0}', space=vmem, size = 0x4000, scoped, tag = 'output window, operand 0']
    %10 = vsyncpa [#allocation3], 0
    %11 = vsyncpa [#allocation6], 0
    %12 = vsyncpa [#allocation4], 0
    %s13 = scalar_lea.sflag [#allocation4], 1
    %14 = vsyncpa %s13, 0
    loop: start=0, step=1, limit=4
    $region2: #{tpu_custom_call.1} parent=1 // loop_pre_header
      _
    $region3: #{tpu_custom_call.1} parent=1 // loop_header
      %s16 = sphi 0, %s20
      %p17 = scmp.ge.s32.totalorder %s16, 4
      %s26 = sphi 0, %s28
      %s29 = sphi 0, %s26
      %s30 = sphi 0, %s29
      %s46 = sphi 0, %s30
      %s50 = sphi 0, %s50
      %s52 = sphi 0, %s50
      %s53 = sphi 0, %s52
      %s67 = sphi 0, %s53
      %s71 = sphi 0, %s71
      %s73 = sphi 0, %s71
      %s74 = sphi 0, %s73
      %s88 = sphi 0, %s74
      %s92 = sphi 0, %s92
      %s94 = sphi 0, %s92
      %s95 = sphi 0, %s94
      %s109 = sphi 0, %s95
      %s113 = sphi 0, %s113
      %s115 = sphi 0, %s113
      %s116 = sphi 0, %s115
      %s130 = sphi 0, %s116
      %s136 = sphi 0, %s138
      %s139 = sphi 0, %s136
      %s140 = sphi 0, %s139
      %s156 = sphi 0, %s140
    $region4: #{tpu_custom_call.1} parent=1 // loop_header_branch
      %19 = sbr.rel (%p17) target = $region8
    $region5: #{tpu_custom_call.1} parent=1 // loop_body
      %s21 = ssub.s32 %s16, 1
      %s22 = ssub.s32 %s16, 2
      %s23 = sadd.s32 %s16, 1
      %s24 = ssub.s32 %s16, %s23
      %p25 = scmp.eq.s32.totalorder %s24, 0
      %s27 = sadd.s32 %s26, 1
      %s28 = scalar_select %p25, %s26, %s27
      %p31 = pneg %p25
      %p32 = scmp.eq.s32.totalorder %s16, 1
      %p33 = por %p31, %p32
      %p34 = scmp.ne.s32.totalorder %s26, %s29
      %p35 = scmp.eq.s32.totalorder %s16, 0
      %p36 = por %p34, %p35
      %p37 = scmp.ne.s32.totalorder %s26, %s29
      %p38 = scmp.eq.s32.totalorder %s21, 1
      %p39 = por %p37, %p38
      %p40 = scmp.ne.s32.totalorder %s29, %s30
      %p41 = scmp.eq.s32.totalorder %s21, 0
      %p42 = por %p40, %p41
      %p43 = scmp.ne.s32.totalorder %s29, %s30
      %p44 = scmp.eq.s32.totalorder %s22, 1
      %p45 = por %p43, %p44
      %p47 = scmp.ne.s32.totalorder %s30, %s46
      %p48 = scmp.eq.s32.totalorder %s22, 0
      %p49 = por %p47, %p48
      %s51 = sadd.s32 %s50, 1
      %p54 = scmp.eq.s32.totalorder %s16, 1
      %p55 = scmp.ne.s32.totalorder %s50, %s52
      %p56 = scmp.eq.s32.totalorder %s16, 0
      %p57 = por %p55, %p56
      %p58 = scmp.ne.s32.totalorder %s50, %s52
      %p59 = scmp.eq.s32.totalorder %s21, 1
      %p60 = por %p58, %p59
      %p61 = scmp.ne.s32.totalorder %s52, %s53
      %p62 = scmp.eq.s32.totalorder %s21, 0
      %p63 = por %p61, %p62
      %p64 = scmp.ne.s32.totalorder %s52, %s53
      %p65 = scmp.eq.s32.totalorder %s22, 1
      %p66 = por %p64, %p65
      %p68 = scmp.ne.s32.totalorder %s53, %s67
      %p69 = scmp.eq.s32.totalorder %s22, 0
      %p70 = por %p68, %p69
      %s72 = sadd.s32 %s71, 1
      %p75 = scmp.eq.s32.totalorder %s16, 1
      %p76 = scmp.ne.s32.totalorder %s71, %s73
      %p77 = scmp.eq.s32.totalorder %s16, 0
      %p78 = por %p76, %p77
      %p79 = scmp.ne.s32.totalorder %s71, %s73
      %p80 = scmp.eq.s32.totalorder %s21, 1
      %p81 = por %p79, %p80
      %p82 = scmp.ne.s32.totalorder %s73, %s74
      %p83 = scmp.eq.s32.totalorder %s21, 0
      %p84 = por %p82, %p83
      %p85 = scmp.ne.s32.totalorder %s73, %s74
      %p86 = scmp.eq.s32.totalorder %s22, 1
      %p87 = por %p85, %p86
      %p89 = scmp.ne.s32.totalorder %s74, %s88
      %p90 = scmp.eq.s32.totalorder %s22, 0
      %p91 = por %p89, %p90
      %s93 = sadd.s32 %s92, 1
      %p96 = scmp.eq.s32.totalorder %s16, 1
      %p97 = scmp.ne.s32.totalorder %s92, %s94
      %p98 = scmp.eq.s32.totalorder %s16, 0
      %p99 = por %p97, %p98
      %p100 = scmp.ne.s32.totalorder %s92, %s94
      %p101 = scmp.eq.s32.totalorder %s21, 1
      %p102 = por %p100, %p101
      %p103 = scmp.ne.s32.totalorder %s94, %s95
      %p104 = scmp.eq.s32.totalorder %s21, 0
      %p105 = por %p103, %p104
      %p106 = scmp.ne.s32.totalorder %s94, %s95
      %p107 = scmp.eq.s32.totalorder %s22, 1
      %p108 = por %p106, %p107
      %p110 = scmp.ne.s32.totalorder %s95, %s109
      %p111 = scmp.eq.s32.totalorder %s22, 0
      %p112 = por %p110, %p111
      %s114 = sadd.s32 %s113, 1
      %p117 = scmp.eq.s32.totalorder %s16, 1
      %p118 = scmp.ne.s32.totalorder %s113, %s115
      %p119 = scmp.eq.s32.totalorder %s16, 0
      %p120 = por %p118, %p119
      %p121 = scmp.ne.s32.totalorder %s113, %s115
      %p122 = scmp.eq.s32.totalorder %s21, 1
      %p123 = por %p121, %p122
      %p124 = scmp.ne.s32.totalorder %s115, %s116
      %p125 = scmp.eq.s32.totalorder %s21, 0
      %p126 = por %p124, %p125
      %p127 = scmp.ne.s32.totalorder %s115, %s116
      %p128 = scmp.eq.s32.totalorder %s22, 1
      %p129 = por %p127, %p128
      %p131 = scmp.ne.s32.totalorder %s116, %s130
      %p132 = scmp.eq.s32.totalorder %s22, 0
      %p133 = por %p131, %p132
      %s134 = ssub.s32 %s16, %s23
      %p135 = scmp.eq.s32.totalorder %s134, 0
      %s137 = sadd.s32 %s136, 1
      %s138 = scalar_select %p135, %s136, %s137
      %p141 = pneg %p135
      %p142 = scmp.eq.s32.totalorder %s16, 1
      %p143 = por %p141, %p142
      %p144 = scmp.ne.s32.totalorder %s136, %s139
      %p145 = scmp.eq.s32.totalorder %s16, 0
      %p146 = por %p144, %p145
      %p147 = scmp.ne.s32.totalorder %s136, %s139
      %p148 = scmp.eq.s32.totalorder %s21, 1
      %p149 = por %p147, %p148
      %p150 = scmp.ne.s32.totalorder %s139, %s140
      %p151 = scmp.eq.s32.totalorder %s21, 0
      %p152 = por %p150, %p151
      %p153 = scmp.ne.s32.totalorder %s139, %s140
      %p154 = scmp.eq.s32.totalorder %s22, 1
      %p155 = por %p153, %p154
      %p157 = scmp.ne.s32.totalorder %s140, %s156
      %p158 = scmp.eq.s32.totalorder %s22, 0
      %p159 = por %p157, %p158
      %p160 = scmp.le.s32.totalorder 1, %s16
      %p161 = scmp.lt.s32.totalorder %s16, 3
      %p162 = pnand %p160, %p161
      %p163 = pneg %p162
      // Predicated region
      $region9: #{tpu_custom_call.1} parent=5 // pred_check
        _
      $region10: #{tpu_custom_call.1} parent=5 // pred_check_branch
        %165 = sbr.rel (%p162) target = $region12
      $region11: #{tpu_custom_call.1} parent=5 // pred_region
        %s166 = ssub.s32 %s16, 1
        // Predicated region
        $region13: #{tpu_custom_call.1} parent=11 // pred_check
          %p167 = pneg %p63
        $region14: #{tpu_custom_call.1} parent=11 // pred_check_branch
          %169 = sbr.rel (%p167) target = $region16
        $region15: #{tpu_custom_call.1} parent=11 // pred_region
          %s171 = ssub.s32 1536, 1536
          %172 = vsyncadd [#allocation3], %s171
          %s173 = sshll.u32 [#allocation2], 4
          %s174 = int_to_ptr.vmem [resolvable:$true] %s173
          %179 = dma.hbm_to_vmem [thread:$0]  %s1, 1536, %s174, [#allocation3], 64, 64, 4
        $region16: #{tpu_custom_call.1} parent=11 // pred_fallthru
          _
        // Predicated region
        $region17: #{tpu_custom_call.1} parent=11 // pred_check
          %p180 = pneg %p84
        $region18: #{tpu_custom_call.1} parent=11 // pred_check_branch
          %182 = sbr.rel (%p180) target = $region20
        $region19: #{tpu_custom_call.1} parent=11 // pred_region
          _
        $region20: #{tpu_custom_call.1} parent=11 // pred_fallthru
          _
        // Predicated region
        $region21: #{tpu_custom_call.1} parent=11 // pred_check
          %p183 = pneg %p105
        $region22: #{tpu_custom_call.1} parent=11 // pred_check_branch
          %185 = sbr.rel (%p183) target = $region24
        $region23: #{tpu_custom_call.1} parent=11 // pred_region
          %s187 = ssub.s32 3072, 3072
          %188 = vsyncadd [#allocation6], %s187
          %s189 = sshll.u32 [#allocation5], 4
          %s190 = int_to_ptr.vmem [resolvable:$true] %s189
          %195 = dma.hbm_to_vmem [thread:$0]  %s3, 3072, %s190, [#allocation6], 64, 64, 4
        $region24: #{tpu_custom_call.1} parent=11 // pred_fallthru
          _
        // Predicated region
        $region25: #{tpu_custom_call.1} parent=11 // pred_check
          %p196 = pneg %p126
        $region26: #{tpu_custom_call.1} parent=11 // pred_check_branch
          %198 = sbr.rel (%p196) target = $region28
        $region27: #{tpu_custom_call.1} parent=11 // pred_region
          _
        $region28: #{tpu_custom_call.1} parent=11 // pred_fallthru
          _
      $region12: #{tpu_custom_call.1} parent=5 // pred_fallthru
        _
      %p199 = scmp.lt.s32.totalorder %s16, 2
      // Predicated region
      $region29: #{tpu_custom_call.1} parent=5 // pred_check
        %p200 = pneg %p199
      $region30: #{tpu_custom_call.1} parent=5 // pred_check_branch
        %202 = sbr.rel (%p200) target = $region32
      $region31: #{tpu_custom_call.1} parent=5 // pred_region
        // Predicated region
        $region33: #{tpu_custom_call.1} parent=31 // pred_check
          %p203 = pneg %p36
        $region34: #{tpu_custom_call.1} parent=31 // pred_check_branch
          %205 = sbr.rel (%p203) target = $region36
        $region35: #{tpu_custom_call.1} parent=31 // pred_region
          %p206 = scmp.lt.s32.totalorder %s16, 1
          %s207 = scalar_select %p206, %s16, 1
          %s208 = smul.addr %s207, 3
          %s209 = smul.addr %s208, 8
          %s210 = scalar_lea.vmem %s0, %s209
        $region36: #{tpu_custom_call.1} parent=31 // pred_fallthru
          _
      $region32: #{tpu_custom_call.1} parent=5 // pred_fallthru
        _
      %p211 = scmp.le.s32.totalorder 1, %s16
      %p212 = scmp.lt.s32.totalorder %s16, 3
      %p213 = pnand %p211, %p212
      %p214 = pneg %p213
      // Predicated region
      $region37: #{tpu_custom_call.1} parent=5 // pred_check
        _
      $region38: #{tpu_custom_call.1} parent=5 // pred_check_branch
        %216 = sbr.rel (%p213) target = $region40
      $region39: #{tpu_custom_call.1} parent=5 // pred_region
        %s217 = ssub.s32 %s16, 1
        // Predicated region
        $region41: #{tpu_custom_call.1} parent=39 // pred_check
          %p218 = pneg %p63
        $region42: #{tpu_custom_call.1} parent=39 // pred_check_branch
          %220 = sbr.rel (%p218) target = $region44
        $region43: #{tpu_custom_call.1} parent=39 // pred_region
          %221 = dma.done [#allocation3], 1536
        $region44: #{tpu_custom_call.1} parent=39 // pred_fallthru
          _
        // Predicated region
        $region45: #{tpu_custom_call.1} parent=39 // pred_check
          %p222 = pneg %p105
        $region46: #{tpu_custom_call.1} parent=39 // pred_check_branch
          %224 = sbr.rel (%p222) target = $region48
        $region47: #{tpu_custom_call.1} parent=39 // pred_region
          %225 = dma.done [#allocation6], 3072
        $region48: #{tpu_custom_call.1} parent=39 // pred_fallthru
          _
        %p226 = scmp.lt.s32.totalorder %s21, 1
        %s227 = scalar_select %p226, %s21, 1
        %s228 = smul.addr %s227, 3
        %s229 = smul.addr %s228, 8
        %s230 = scalar_lea.vmem %s0, %s229
        %p231 = pneg %p42
        %p232 = pneg %p39
        %p233 = pneg %p63
        %p234 = pneg %p60
        %p235 = pneg %p84
        %p236 = pneg %p81
        %p237 = pneg %p105
        %p238 = pneg %p102
        %p239 = pneg %p126
        %p240 = pneg %p123
        %p241 = pneg %p152
        %p242 = pneg %p149
        %s243 = sand.u32 %s139, 1
        %s244 = scalar_lea.sflag [#allocation4], %s243
        %s245 = sand.u32 %s139, 1
        %s246 = smul.addr %s245, 16
        %s247 = scalar_lea.vmem [#allocation7], %s246
        %p248 = scmp.lt.s32.totalorder %s21, 1
        %s249 = scalar_select %p248, %s21, 1
        %s250 = smul.addr %s249, 3
        %s251 = smul.addr %s250, 8
        %s252 = scalar_lea.vmem %s0, %s251
        %v254 = vld [vmem:[%s252] sm:$0xff]
        %v255 = vld [vmem:[%s252 + $0x8] sm:$0xff]
        %v256 = vld [vmem:[%s252 + $0x10] sm:$0x3]
        %v257 = vld [vmem:[%s2] sm:$0x1]
        %v259 = vlaneseq
        %v260 = vshrl.u32 %v259, 7
        %v261 = vsub.s32 0, %v260
        %v262 = vrot.slane %v257, %v261
        %v264 = vpack.c.bf16 %v255, %v254
        %v265 = vld [vmem:[#allocation2] sm:$0xf]
        %v266 = vld [vmem:[#allocation2 + $0x4] sm:$0xf]
        %v267 = vld [vmem:[#allocation2 + $0x8] sm:$0xf]
        %v268 = vld [vmem:[#allocation2 + $0xc] sm:$0xf]
        %v269 = vld [vmem:[#allocation2 + $0x10] sm:$0xf]
        %v270 = vld [vmem:[#allocation2 + $0x14] sm:$0xf]
        %v271 = vld [vmem:[#allocation2 + $0x18] sm:$0xf]
        %v272 = vld [vmem:[#allocation2 + $0x1c] sm:$0xf]
        %v281 = vunpack.c.l.b16 %v265
        %v282 = vunpack.c.l.b16 %v266
        %v283 = vunpack.c.l.b16 %v267
        %v284 = vunpack.c.l.b16 %v268
        %v285 = vunpack.c.l.b16 %v269
        %v286 = vunpack.c.l.b16 %v270
        %v287 = vunpack.c.l.b16 %v271
        %v288 = vunpack.c.l.b16 %v272
        %v289 = vpack.c.b16 %v282, %v281
        %v290 = vpack.c.b16 %v284, %v283
        %v291 = vpack.c.b16 %v286, %v285
        %v292 = vpack.c.b16 %v288, %v287
        %vm297 = vcmask 523264
        %v299 = vsel %vm297, %v264, 0
        %301 = vmatprep.subr.bf16.mxu0 0
        %302 = vmatpush1.bf16.msra.mxu0 0
        %303 = vmatprep.subr.bf16.mxu0 0
        %304 = vmatpush1.bf16.msra.mxu0 0
        %305 = vmatprep.subr.bf16.mxu0 0
        %306 = vmatpush1.bf16.msra.mxu0 0
        %307 = vmatprep.subr.bf16.mxu0 0
        %308 = vmatpush1.bf16.msra.mxu0 0
        %309 = vmatprep.subr.bf16.mxu0 0
        %310 = vmatpush1.bf16.msra.mxu0 %v292
        %311 = vmatprep.subr.bf16.mxu0 0
        %312 = vmatpush1.bf16.msra.mxu0 %v291
        %313 = vmatprep.subr.bf16.mxu0 0
        %314 = vmatpush1.bf16.msra.mxu0 %v290
        %315 = vmatprep.subr.bf16.mxu0 0
        %316 = vmatpush1.bf16.msra.mxu0 %v289
        %317 = vmatprep.subr.bf16.mxu0 0
        %318 = vmatpush2.bf16.msra.mxu0 0
        %319 = vmatprep.subr.bf16.mxu0 0
        %320 = vmatpush2.bf16.msra.mxu0 0
        %321 = vmatprep.subr.bf16.mxu0 0
        %322 = vmatpush2.bf16.msra.mxu0 0
        %323 = vmatprep.subr.bf16.mxu0 0
        %324 = vmatpush2.bf16.msra.mxu0 0
        %325 = vmatprep.subr.bf16.mxu0 0
        %326 = vmatpush2.bf16.msra.mxu0 0
        %327 = vmatprep.subr.bf16.mxu0 0
        %328 = vmatpush2.bf16.msra.mxu0 0
        %329 = vmatprep.subr.bf16.mxu0 0
        %330 = vmatpush2.bf16.msra.mxu0 0
        %331 = vmatprep.subr.bf16.mxu0 0
        %332 = vmatpush2.bf16.msra.mxu0 0
        %333 = vmatprep.mubr.bf16.mxu0 0
        %334 = vmatmul.mubr.bf16.gmra.mxu0 %v299
        %v335 = vpop.f32.mrf.mxu0
        %v336 = vadd.f32 0.0, %v335
        %v337 = vpop.f32.mrf.mxu0
        %v338 = vpop.f32.mrf.mxu0
        %v339 = vadd.f32 0.0, %v338
        %v340 = vpop.f32.mrf.mxu0
        %341 = vdwg.mxu0
        %v342 = vadd.f32 %v262, %v336
        %v343 = vadd.f32 %v262, %v339
        %v344 = vpack.c.bf16 %v256, %v256
        %s345 = scalar_lea.vmem [#allocation2], 32
        %v346 = vld [vmem:[%s345] sm:$0xf]
        %v347 = vld [vmem:[%s345 + $0x4] sm:$0xf]
        %v348 = vld [vmem:[%s345 + $0x8] sm:$0xf]
        %v349 = vld [vmem:[%s345 + $0xc] sm:$0xf]
        %v350 = vld [vmem:[%s345 + $0x10] sm:$0xf]
        %v351 = vld [vmem:[%s345 + $0x14] sm:$0xf]
        %v352 = vld [vmem:[%s345 + $0x18] sm:$0xf]
        %v353 = vld [vmem:[%s345 + $0x1c] sm:$0xf]
        %vm354 = vsmask.f32 7424
        %v355 = vshrl.u32 %v264, 16
        %v357 = vshll.u32 %v264, 16
        %v359 = vrot.slane %v357, 1
        %v360 = vor.u32 %v355, %v359
        %v362 = vshll.u32 %v344, 16
        %v364 = vrot.slane %v362, 1
        %v365 = vsel %vm354, %v360, %v364
        %v374 = vunpack.c.l.b16 %v346
        %v375 = vunpack.c.l.b16 %v347
        %v376 = vunpack.c.l.b16 %v348
        %v377 = vunpack.c.l.b16 %v349
        %v378 = vunpack.c.l.b16 %v350
        %v379 = vunpack.c.l.b16 %v351
        %v380 = vunpack.c.l.b16 %v352
        %v381 = vunpack.c.l.b16 %v353
        %v382 = vpack.c.b16 %v375, %v374
        %v383 = vpack.c.b16 %v377, %v376
        %v384 = vpack.c.b16 %v379, %v378
        %v385 = vpack.c.b16 %v381, %v380
        %v391 = vsel %vm297, %v365, 0
        %393 = vmatprep.subr.bf16.mxu0 0
        %394 = vmatpush1.bf16.msra.mxu0 0
        %395 = vmatprep.subr.bf16.mxu0 0
        %396 = vmatpush1.bf16.msra.mxu0 0
        %397 = vmatprep.subr.bf16.mxu0 0
        %398 = vmatpush1.bf16.msra.mxu0 0
        %399 = vmatprep.subr.bf16.mxu0 0
        %400 = vmatpush1.bf16.msra.mxu0 0
        %401 = vmatprep.subr.bf16.mxu0 0
        %402 = vmatpush1.bf16.msra.mxu0 %v385
        %403 = vmatprep.subr.bf16.mxu0 0
        %404 = vmatpush1.bf16.msra.mxu0 %v384
        %405 = vmatprep.subr.bf16.mxu0 0
        %406 = vmatpush1.bf16.msra.mxu0 %v383
        %407 = vmatprep.subr.bf16.mxu0 0
        %408 = vmatpush1.bf16.msra.mxu0 %v382
        %409 = vmatprep.subr.bf16.mxu0 0
        %410 = vmatpush2.bf16.msra.mxu0 0
        %411 = vmatprep.subr.bf16.mxu0 0
        %412 = vmatpush2.bf16.msra.mxu0 0
        %413 = vmatprep.subr.bf16.mxu0 0
        %414 = vmatpush2.bf16.msra.mxu0 0
        %415 = vmatprep.subr.bf16.mxu0 0
        %416 = vmatpush2.bf16.msra.mxu0 0
        %417 = vmatprep.subr.bf16.mxu0 0
        %418 = vmatpush2.bf16.msra.mxu0 0
        %419 = vmatprep.subr.bf16.mxu0 0
        %420 = vmatpush2.bf16.msra.mxu0 0
        %421 = vmatprep.subr.bf16.mxu0 0
        %422 = vmatpush2.bf16.msra.mxu0 0
        %423 = vmatprep.subr.bf16.mxu0 0
        %424 = vmatpush2.bf16.msra.mxu0 0
        %425 = vmatprep.mubr.bf16.mxu0 0
        %426 = vmatmul.mubr.bf16.gmra.mxu0 %v391
        %v427 = vpop.f32.mrf.mxu0
        %v428 = vadd.f32 0.0, %v427
        %v429 = vpop.f32.mrf.mxu0
        %v430 = vpop.f32.mrf.mxu0
        %v431 = vadd.f32 0.0, %v430
        %v432 = vpop.f32.mrf.mxu0
        %433 = vdwg.mxu0
        %v434 = vadd.f32 %v342, %v428
        %v435 = vadd.f32 %v343, %v431
        %s436 = scalar_lea.vmem [#allocation2], 64
        %v437 = vld [vmem:[%s436] sm:$0xf]
        %v438 = vld [vmem:[%s436 + $0x4] sm:$0xf]
        %v439 = vld [vmem:[%s436 + $0x8] sm:$0xf]
        %v440 = vld [vmem:[%s436 + $0xc] sm:$0xf]
        %v441 = vld [vmem:[%s436 + $0x10] sm:$0xf]
        %v442 = vld [vmem:[%s436 + $0x14] sm:$0xf]
        %v443 = vld [vmem:[%s436 + $0x18] sm:$0xf]
        %v444 = vld [vmem:[%s436 + $0x1c] sm:$0xf]
        %vm447 = vcmask 1046528
        %v448 = vrot.slane %v264, 1
        %v449 = vrot.slane %v344, 1
        %v450 = vsel %vm447, %v448, %v449
        %v459 = vunpack.c.l.b16 %v437
        %v460 = vunpack.c.l.b16 %v438
        %v461 = vunpack.c.l.b16 %v439
        %v462 = vunpack.c.l.b16 %v440
        %v463 = vunpack.c.l.b16 %v441
        %v464 = vunpack.c.l.b16 %v442
        %v465 = vunpack.c.l.b16 %v443
        %v466 = vunpack.c.l.b16 %v444
        %v467 = vpack.c.b16 %v460, %v459
        %v468 = vpack.c.b16 %v462, %v461
        %v469 = vpack.c.b16 %v464, %v463
        %v470 = vpack.c.b16 %v466, %v465
        %v476 = vsel %vm297, %v450, 0
        %478 = vmatprep.subr.bf16.mxu0 0
        %479 = vmatpush1.bf16.msra.mxu0 0
        %480 = vmatprep.subr.bf16.mxu0 0
        %481 = vmatpush1.bf16.msra.mxu0 0
        %482 = vmatprep.subr.bf16.mxu0 0
        %483 = vmatpush1.bf16.msra.mxu0 0
        %484 = vmatprep.subr.bf16.mxu0 0
        %485 = vmatpush1.bf16.msra.mxu0 0
        %486 = vmatprep.subr.bf16.mxu0 0
        %487 = vmatpush1.bf16.msra.mxu0 %v470
        %488 = vmatprep.subr.bf16.mxu0 0
        %489 = vmatpush1.bf16.msra.mxu0 %v469
        %490 = vmatprep.subr.bf16.mxu0 0
        %491 = vmatpush1.bf16.msra.mxu0 %v468
        %492 = vmatprep.subr.bf16.mxu0 0
        %493 = vmatpush1.bf16.msra.mxu0 %v467
        %494 = vmatprep.subr.bf16.mxu0 0
        %495 = vmatpush2.bf16.msra.mxu0 0
        %496 = vmatprep.subr.bf16.mxu0 0
        %497 = vmatpush2.bf16.msra.mxu0 0
        %498 = vmatprep.subr.bf16.mxu0 0
        %499 = vmatpush2.bf16.msra.mxu0 0
        %500 = vmatprep.subr.bf16.mxu0 0
        %501 = vmatpush2.bf16.msra.mxu0 0
        %502 = vmatprep.subr.bf16.mxu0 0
        %503 = vmatpush2.bf16.msra.mxu0 0
        %504 = vmatprep.subr.bf16.mxu0 0
        %505 = vmatpush2.bf16.msra.mxu0 0
        %506 = vmatprep.subr.bf16.mxu0 0
        %507 = vmatpush2.bf16.msra.mxu0 0
        %508 = vmatprep.subr.bf16.mxu0 0
        %509 = vmatpush2.bf16.msra.mxu0 0
        %510 = vmatprep.mubr.bf16.mxu0 0
        %511 = vmatmul.mubr.bf16.gmra.mxu0 %v476
        %v512 = vpop.f32.mrf.mxu0
        %v513 = vadd.f32 0.0, %v512
        %v514 = vpop.f32.mrf.mxu0
        %v515 = vpop.f32.mrf.mxu0
        %v516 = vadd.f32 0.0, %v515
        %v517 = vpop.f32.mrf.mxu0
        %518 = vdwg.mxu0
        %v519 = vadd.f32 %v434, %v513
        %v520 = vadd.f32 %v435, %v516
        %v521 = vmax.f32 %v519, 0.0
        %v522 = vmax.f32 %v520, 0.0
        %vm525 = vcmask 1040384
        %v526 = vrot.slane %v521, 7
        %v527 = vrot.slane %v522, 7
        %v528 = vsel %vm525, %v526, %v527
        %v532 = vsel %vm525, 0.0, %v526
        %v533 = vsel %vm525, %v527, 0.0
        %v534 = vld [vmem:[%s4] sm:$0x1]
        %v536 = vlaneseq
        %v537 = vshrl.u32 %v536, 7
        %v538 = vsub.s32 0, %v537
        %v539 = vrot.slane %v534, %v538
        %v541 = vpack.c.bf16 %v528, %v532
        %v542 = vld [vmem:[#allocation5] sm:$0xf]
        %v543 = vld [vmem:[#allocation5 + $0x4] sm:$0xf]
        %v544 = vld [vmem:[#allocation5 + $0x8] sm:$0xf]
        %v545 = vld [vmem:[#allocation5 + $0xc] sm:$0xf]
        %v546 = vld [vmem:[#allocation5 + $0x10] sm:$0xf]
        %v547 = vld [vmem:[#allocation5 + $0x14] sm:$0xf]
        %v548 = vld [vmem:[#allocation5 + $0x18] sm:$0xf]
        %v549 = vld [vmem:[#allocation5 + $0x1c] sm:$0xf]
        %v550 = vld [vmem:[#allocation5 + $0x20] sm:$0xf]
        %v551 = vld [vmem:[#allocation5 + $0x24] sm:$0xf]
        %v552 = vld [vmem:[#allocation5 + $0x28] sm:$0xf]
        %v553 = vld [vmem:[#allocation5 + $0x2c] sm:$0xf]
        %v554 = vld [vmem:[#allocation5 + $0x30] sm:$0xf]
        %v555 = vld [vmem:[#allocation5 + $0x34] sm:$0xf]
        %v556 = vld [vmem:[#allocation5 + $0x38] sm:$0xf]
        %v557 = vld [vmem:[#allocation5 + $0x3c] sm:$0xf]
        %v574 = vunpack.c.l.b16 %v542
        %v575 = vunpack.c.l.b16 %v543
        %v576 = vunpack.c.l.b16 %v544
        %v577 = vunpack.c.l.b16 %v545
        %v578 = vunpack.c.l.b16 %v546
        %v579 = vunpack.c.l.b16 %v547
        %v580 = vunpack.c.l.b16 %v548
        %v581 = vunpack.c.l.b16 %v549
        %v582 = vunpack.c.l.b16 %v550
        %v583 = vunpack.c.l.b16 %v551
        %v584 = vunpack.c.l.b16 %v552
        %v585 = vunpack.c.l.b16 %v553
        %v586 = vunpack.c.l.b16 %v554
        %v587 = vunpack.c.l.b16 %v555
        %v588 = vunpack.c.l.b16 %v556
        %v589 = vunpack.c.l.b16 %v557
        %v590 = vpack.c.b16 %v575, %v574
        %v591 = vpack.c.b16 %v577, %v576
        %v592 = vpack.c.b16 %v579, %v578
        %v593 = vpack.c.b16 %v581, %v580
        %v594 = vpack.c.b16 %v583, %v582
        %v595 = vpack.c.b16 %v585, %v584
        %v596 = vpack.c.b16 %v587, %v586
        %v597 = vpack.c.b16 %v589, %v588
        %606 = vmatprep.subr.bf16.mxu0 0
        %607 = vmatpush1.bf16.msra.mxu0 %v597
        %608 = vmatprep.subr.bf16.mxu0 0
        %609 = vmatpush1.bf16.msra.mxu0 %v596
        %610 = vmatprep.subr.bf16.mxu0 0
        %611 = vmatpush1.bf16.msra.mxu0 %v595
        %612 = vmatprep.subr.bf16.mxu0 0
        %613 = vmatpush1.bf16.msra.mxu0 %v594
        %614 = vmatprep.subr.bf16.mxu0 0
        %615 = vmatpush1.bf16.msra.mxu0 %v593
        %616 = vmatprep.subr.bf16.mxu0 0
        %617 = vmatpush1.bf16.msra.mxu0 %v592
        %618 = vmatprep.subr.bf16.mxu0 0
        %619 = vmatpush1.bf16.msra.mxu0 %v591
        %620 = vmatprep.subr.bf16.mxu0 0
        %621 = vmatpush1.bf16.msra.mxu0 %v590
        %622 = vmatprep.subr.bf16.mxu0 0
        %623 = vmatpush2.bf16.msra.mxu0 0
        %624 = vmatprep.subr.bf16.mxu0 0
        %625 = vmatpush2.bf16.msra.mxu0 0
        %626 = vmatprep.subr.bf16.mxu0 0
        %627 = vmatpush2.bf16.msra.mxu0 0
        %628 = vmatprep.subr.bf16.mxu0 0
        %629 = vmatpush2.bf16.msra.mxu0 0
        %630 = vmatprep.subr.bf16.mxu0 0
        %631 = vmatpush2.bf16.msra.mxu0 0
        %632 = vmatprep.subr.bf16.mxu0 0
        %633 = vmatpush2.bf16.msra.mxu0 0
        %634 = vmatprep.subr.bf16.mxu0 0
        %635 = vmatpush2.bf16.msra.mxu0 0
        %636 = vmatprep.subr.bf16.mxu0 0
        %637 = vmatpush2.bf16.msra.mxu0 0
        %638 = vmatprep.mubr.bf16.mxu0 0
        %639 = vmatmul.mubr.bf16.gmra.mxu0 %v541
        %v640 = vpop.f32.mrf.mxu0
        %v641 = vadd.f32 0.0, %v640
        %v642 = vpop.f32.mrf.mxu0
        %v643 = vpop.f32.mrf.mxu0
        %v644 = vadd.f32 0.0, %v643
        %v645 = vpop.f32.mrf.mxu0
        %646 = vdwg.mxu0
        %v647 = vadd.f32 %v539, %v641
        %v648 = vadd.f32 %v539, %v644
        %v649 = vpack.c.bf16 %v533, %v533
        %s650 = scalar_lea.vmem [#allocation5], 64
        %v651 = vld [vmem:[%s650] sm:$0xf]
        %v652 = vld [vmem:[%s650 + $0x4] sm:$0xf]
        %v653 = vld [vmem:[%s650 + $0x8] sm:$0xf]
        %v654 = vld [vmem:[%s650 + $0xc] sm:$0xf]
        %v655 = vld [vmem:[%s650 + $0x10] sm:$0xf]
        %v656 = vld [vmem:[%s650 + $0x14] sm:$0xf]
        %v657 = vld [vmem:[%s650 + $0x18] sm:$0xf]
        %v658 = vld [vmem:[%s650 + $0x1c] sm:$0xf]
        %v659 = vld [vmem:[%s650 + $0x20] sm:$0xf]
        %v660 = vld [vmem:[%s650 + $0x24] sm:$0xf]
        %v661 = vld [vmem:[%s650 + $0x28] sm:$0xf]
        %v662 = vld [vmem:[%s650 + $0x2c] sm:$0xf]
        %v663 = vld [vmem:[%s650 + $0x30] sm:$0xf]
        %v664 = vld [vmem:[%s650 + $0x34] sm:$0xf]
        %v665 = vld [vmem:[%s650 + $0x38] sm:$0xf]
        %v666 = vld [vmem:[%s650 + $0x3c] sm:$0xf]
        %v668 = vshrl.u32 %v541, 16
        %v670 = vshll.u32 %v541, 16
        %v672 = vrot.slane %v670, 1
        %v673 = vor.u32 %v668, %v672
        %v675 = vshll.u32 %v649, 16
        %v677 = vrot.slane %v675, 1
        %v678 = vsel %vm354, %v673, %v677
        %v696 = vunpack.c.l.b16 %v651
        %v697 = vunpack.c.l.b16 %v652
        %v698 = vunpack.c.l.b16 %v653
        %v699 = vunpack.c.l.b16 %v654
        %v700 = vunpack.c.l.b16 %v655
        %v701 = vunpack.c.l.b16 %v656
        %v702 = vunpack.c.l.b16 %v657
        %v703 = vunpack.c.l.b16 %v658
        %v704 = vunpack.c.l.b16 %v659
        %v705 = vunpack.c.l.b16 %v660
        %v706 = vunpack.c.l.b16 %v661
        %v707 = vunpack.c.l.b16 %v662
        %v708 = vunpack.c.l.b16 %v663
        %v709 = vunpack.c.l.b16 %v664
        %v710 = vunpack.c.l.b16 %v665
        %v711 = vunpack.c.l.b16 %v666
        %v712 = vpack.c.b16 %v697, %v696
        %v713 = vpack.c.b16 %v699, %v698
        %v714 = vpack.c.b16 %v701, %v700
        %v715 = vpack.c.b16 %v703, %v702
        %v716 = vpack.c.b16 %v705, %v704
        %v717 = vpack.c.b16 %v707, %v706
        %v718 = vpack.c.b16 %v709, %v708
        %v719 = vpack.c.b16 %v711, %v710
        %728 = vmatprep.subr.bf16.mxu0 0
        %729 = vmatpush1.bf16.msra.mxu0 %v719
        %730 = vmatprep.subr.bf16.mxu0 0
        %731 = vmatpush1.bf16.msra.mxu0 %v718
        %732 = vmatprep.subr.bf16.mxu0 0
        %733 = vmatpush1.bf16.msra.mxu0 %v717
        %734 = vmatprep.subr.bf16.mxu0 0
        %735 = vmatpush1.bf16.msra.mxu0 %v716
        %736 = vmatprep.subr.bf16.mxu0 0
        %737 = vmatpush1.bf16.msra.mxu0 %v715
        %738 = vmatprep.subr.bf16.mxu0 0
        %739 = vmatpush1.bf16.msra.mxu0 %v714
        %740 = vmatprep.subr.bf16.mxu0 0
        %741 = vmatpush1.bf16.msra.mxu0 %v713
        %742 = vmatprep.subr.bf16.mxu0 0
        %743 = vmatpush1.bf16.msra.mxu0 %v712
        %744 = vmatprep.subr.bf16.mxu0 0
        %745 = vmatpush2.bf16.msra.mxu0 0
        %746 = vmatprep.subr.bf16.mxu0 0
        %747 = vmatpush2.bf16.msra.mxu0 0
        %748 = vmatprep.subr.bf16.mxu0 0
        %749 = vmatpush2.bf16.msra.mxu0 0
        %750 = vmatprep.subr.bf16.mxu0 0
        %751 = vmatpush2.bf16.msra.mxu0 0
        %752 = vmatprep.subr.bf16.mxu0 0
        %753 = vmatpush2.bf16.msra.mxu0 0
        %754 = vmatprep.subr.bf16.mxu0 0
        %755 = vmatpush2.bf16.msra.mxu0 0
        %756 = vmatprep.subr.bf16.mxu0 0
        %757 = vmatpush2.bf16.msra.mxu0 0
        %758 = vmatprep.subr.bf16.mxu0 0
        %759 = vmatpush2.bf16.msra.mxu0 0
        %760 = vmatprep.mubr.bf16.mxu0 0
        %761 = vmatmul.mubr.bf16.gmra.mxu0 %v678
        %v762 = vpop.f32.mrf.mxu0
        %v763 = vadd.f32 0.0, %v762
        %v764 = vpop.f32.mrf.mxu0
        %v765 = vpop.f32.mrf.mxu0
        %v766 = vadd.f32 0.0, %v765
        %v767 = vpop.f32.mrf.mxu0
        %768 = vdwg.mxu0
        %v769 = vadd.f32 %v647, %v763
        %v770 = vadd.f32 %v648, %v766
        %s771 = scalar_lea.vmem [#allocation5], 128
        %v772 = vld [vmem:[%s771] sm:$0xf]
        %v773 = vld [vmem:[%s771 + $0x4] sm:$0xf]
        %v774 = vld [vmem:[%s771 + $0x8] sm:$0xf]
        %v775 = vld [vmem:[%s771 + $0xc] sm:$0xf]
        %v776 = vld [vmem:[%s771 + $0x10] sm:$0xf]
        %v777 = vld [vmem:[%s771 + $0x14] sm:$0xf]
        %v778 = vld [vmem:[%s771 + $0x18] sm:$0xf]
        %v779 = vld [vmem:[%s771 + $0x1c] sm:$0xf]
        %v780 = vld [vmem:[%s771 + $0x20] sm:$0xf]
        %v781 = vld [vmem:[%s771 + $0x24] sm:$0xf]
        %v782 = vld [vmem:[%s771 + $0x28] sm:$0xf]
        %v783 = vld [vmem:[%s771 + $0x2c] sm:$0xf]
        %v784 = vld [vmem:[%s771 + $0x30] sm:$0xf]
        %v785 = vld [vmem:[%s771 + $0x34] sm:$0xf]
        %v786 = vld [vmem:[%s771 + $0x38] sm:$0xf]
        %v787 = vld [vmem:[%s771 + $0x3c] sm:$0xf]
        %v790 = vrot.slane %v541, 1
        %v791 = vrot.slane %v649, 1
        %v792 = vsel %vm447, %v790, %v791
        %v810 = vunpack.c.l.b16 %v772
        %v811 = vunpack.c.l.b16 %v773
        %v812 = vunpack.c.l.b16 %v774
        %v813 = vunpack.c.l.b16 %v775
        %v814 = vunpack.c.l.b16 %v776
        %v815 = vunpack.c.l.b16 %v777
        %v816 = vunpack.c.l.b16 %v778
        %v817 = vunpack.c.l.b16 %v779
        %v818 = vunpack.c.l.b16 %v780
        %v819 = vunpack.c.l.b16 %v781
        %v820 = vunpack.c.l.b16 %v782
        %v821 = vunpack.c.l.b16 %v783
        %v822 = vunpack.c.l.b16 %v784
        %v823 = vunpack.c.l.b16 %v785
        %v824 = vunpack.c.l.b16 %v786
        %v825 = vunpack.c.l.b16 %v787
        %v826 = vpack.c.b16 %v811, %v810
        %v827 = vpack.c.b16 %v813, %v812
        %v828 = vpack.c.b16 %v815, %v814
        %v829 = vpack.c.b16 %v817, %v816
        %v830 = vpack.c.b16 %v819, %v818
        %v831 = vpack.c.b16 %v821, %v820
        %v832 = vpack.c.b16 %v823, %v822
        %v833 = vpack.c.b16 %v825, %v824
        %842 = vmatprep.subr.bf16.mxu0 0
        %843 = vmatpush1.bf16.msra.mxu0 %v833
        %844 = vmatprep.subr.bf16.mxu0 0
        %845 = vmatpush1.bf16.msra.mxu0 %v832
        %846 = vmatprep.subr.bf16.mxu0 0
        %847 = vmatpush1.bf16.msra.mxu0 %v831
        %848 = vmatprep.subr.bf16.mxu0 0
        %849 = vmatpush1.bf16.msra.mxu0 %v830
        %850 = vmatprep.subr.bf16.mxu0 0
        %851 = vmatpush1.bf16.msra.mxu0 %v829
        %852 = vmatprep.subr.bf16.mxu0 0
        %853 = vmatpush1.bf16.msra.mxu0 %v828
        %854 = vmatprep.subr.bf16.mxu0 0
        %855 = vmatpush1.bf16.msra.mxu0 %v827
        %856 = vmatprep.subr.bf16.mxu0 0
        %857 = vmatpush1.bf16.msra.mxu0 %v826
        %858 = vmatprep.subr.bf16.mxu0 0
        %859 = vmatpush2.bf16.msra.mxu0 0
        %860 = vmatprep.subr.bf16.mxu0 0
        %861 = vmatpush2.bf16.msra.mxu0 0
        %862 = vmatprep.subr.bf16.mxu0 0
        %863 = vmatpush2.bf16.msra.mxu0 0
        %864 = vmatprep.subr.bf16.mxu0 0
        %865 = vmatpush2.bf16.msra.mxu0 0
        %866 = vmatprep.subr.bf16.mxu0 0
        %867 = vmatpush2.bf16.msra.mxu0 0
        %868 = vmatprep.subr.bf16.mxu0 0
        %869 = vmatpush2.bf16.msra.mxu0 0
        %870 = vmatprep.subr.bf16.mxu0 0
        %871 = vmatpush2.bf16.msra.mxu0 0
        %872 = vmatprep.subr.bf16.mxu0 0
        %873 = vmatpush2.bf16.msra.mxu0 0
        %874 = vmatprep.mubr.bf16.mxu0 0
        %875 = vmatmul.mubr.bf16.gmra.mxu0 %v792
        %v876 = vpop.f32.mrf.mxu0
        %v877 = vadd.f32 0.0, %v876
        %v878 = vpop.f32.mrf.mxu0
        %v879 = vpop.f32.mrf.mxu0
        %v880 = vadd.f32 0.0, %v879
        %v881 = vpop.f32.mrf.mxu0
        %882 = vdwg.mxu0
        %v883 = vadd.f32 %v769, %v877
        %v884 = vadd.f32 %v770, %v880
        %v885 = vmax.f32 %v883, 0.0
        %v886 = vmax.f32 %v884, 0.0
        %887 = vst [vmem:[%s247] sm:$0xff] %v885
        %888 = vst [vmem:[%s247 + $0x8] sm:$0xff] %v886
        %s889 = sand.u32 %s139, 1
        %s890 = scalar_lea.sflag [#allocation4], %s889
        %s891 = sand.u32 %s139, 1
        %s892 = smul.addr %s891, 16
        %s893 = scalar_lea.vmem [#allocation7], %s892
        // Predicated region
        $region49: #{tpu_custom_call.1} parent=39 // pred_check
          %p894 = pneg %p149
        $region50: #{tpu_custom_call.1} parent=39 // pred_check_branch
          %896 = sbr.rel (%p894) target = $region52
        $region51: #{tpu_custom_call.1} parent=39 // pred_region
          %s898 = ssub.s32 256, 256
          %899 = vsyncadd %s890, %s898
          %s900 = smul.addr %s21, 2
          %s901 = smul.addr %s900, 128
          %s902 = scalar_lea.hbm %s5, %s901
          %s903 = sshll.u32 %s893, 4
          %s904 = int_to_ptr.vmem [resolvable:$true] %s903
          %909 = dma.vmem_to_hbm [thread:$0]  %s904, 256, %s902, %s890, 128, 128, 8
        $region52: #{tpu_custom_call.1} parent=39 // pred_fallthru
          _
      $region40: #{tpu_custom_call.1} parent=5 // pred_fallthru
        _
      %p910 = scmp.le.s32.totalorder 2, %s16
      // Predicated region
      $region53: #{tpu_custom_call.1} parent=5 // pred_check
        %p911 = pneg %p910
      $region54: #{tpu_custom_call.1} parent=5 // pred_check_branch
        %913 = sbr.rel (%p911) target = $region56
      $region55: #{tpu_custom_call.1} parent=5 // pred_region
        %s914 = ssub.s32 %s16, 2
        // Predicated region
        $region57: #{tpu_custom_call.1} parent=55 // pred_check
          %p915 = pneg %p155
        $region58: #{tpu_custom_call.1} parent=55 // pred_check_branch
          %917 = sbr.rel (%p915) target = $region60
        $region59: #{tpu_custom_call.1} parent=55 // pred_region
          %s918 = sand.u32 %s140, 1
          %s919 = scalar_lea.sflag [#allocation4], %s918
          %s920 = sand.u32 %s140, 1
          %s921 = smul.addr %s920, 16
          %s922 = scalar_lea.vmem [#allocation7], %s921
          %923 = dma.done %s919, 256
        $region60: #{tpu_custom_call.1} parent=55 // pred_fallthru
          _
      $region56: #{tpu_custom_call.1} parent=5 // pred_fallthru
        _
    $region6: #{tpu_custom_call.1} parent=1 // loop_footer
      %s20 = sadd.s32 1, %s16
    $region7: #{tpu_custom_call.1} parent=1 // loop_footer_branch
      %15 = sbr.rel target = $region3
    $region8: #{tpu_custom_call.1} parent=1 // loop_exit
      _
    %924 = vsyncpa [#allocation3], 1
    %s925 = scalar_lea.sflag [#allocation3], 1
    %926 = vsyncpa %s925, 1
    %927 = vsyncpa [#allocation6], 1
    %928 = vsyncpa [#allocation4], 1
    %s929 = scalar_lea.sflag [#allocation4], 1
    %930 = vsyncpa %s929, 1

</llo_original>
